<compile_context>
chip_gen: v5e
topology: v5e:2x2
jax: 0.10.0
libtpu: 0.0.40
codegen_flags: <defaults>
</compile_context>

<pallas_src>
import jax
import jax.numpy as jnp
from jax.experimental import pallas as pl
from jax.experimental.pallas import tpu as pltpu


def mlp_kernel(x_ref, w1_ref, b1_ref, w2_ref, b2_ref, w3_ref, b3_ref, o_ref):
    # x: (TB, K) f32, w1: (K,128) bf16, w2: (128,128) bf16 (zero-padded cols),
    # w3: (128,2) bf16 (zero-padded rows), biases f32, out: (TB, 2) f32.
    x = x_ref[...].astype(jnp.bfloat16)             # in-kernel cast (VPU, hidden)

    h1 = jnp.dot(x, w1_ref[...], preferred_element_type=jnp.float32) + b1_ref[...]
    h1 = jnp.maximum(h1, 0.0)                       # ReLU
    # Dropout(0.5) -> identity (inference)

    h2 = jnp.dot(h1.astype(jnp.bfloat16), w2_ref[...],
                 preferred_element_type=jnp.float32) + b2_ref[...]
    h2 = jnp.maximum(h2, 0.0)                       # ReLU (padded cols stay 0)
    # Dropout(0.5) -> identity (inference)

    out = jnp.dot(h2.astype(jnp.bfloat16), w3_ref[...],
                  preferred_element_type=jnp.float32) + b3_ref[...]
    o_ref[...] = out.astype(o_ref.dtype)


def _round_up(a, m):
    return ((a + m - 1) // m) * m


def mlp_forward(x, params, *, tb=2048):
    """x: (B, ...) flattened to (B, input_size). params are float32; cast here."""
    B = x.shape[0]
    x2d = x.reshape(B, -1)                          # nn.Flatten (metadata only, stays f32)
    K = x2d.shape[1]
    w1, b1, w2, b2, w3, b3 = params
    h1_dim = w1.shape[1]
    h2_dim = w2.shape[1]
    n_out = w3.shape[1]
    h2_pad = _round_up(h2_dim, 128)                 # lane-dense middle layer

    # bf16 weights (f32 accumulation inside the kernel); biases stay f32.
    w1b = w1.astype(jnp.bfloat16)
    w2p = jnp.zeros((h1_dim, h2_pad), jnp.bfloat16).at[:, :h2_dim].set(
        w2.astype(jnp.bfloat16))
    b2p = jnp.zeros((1, h2_pad), jnp.float32).at[:, :h2_dim].set(
        b2.reshape(1, h2_dim).astype(jnp.float32))
    w3p = jnp.zeros((h2_pad, n_out), jnp.bfloat16).at[:h2_dim, :].set(
        w3.astype(jnp.bfloat16))
    b1f = b1.reshape(1, h1_dim).astype(jnp.float32)
    b3f = b3.reshape(1, n_out).astype(jnp.float32)

    # --- batch tiling (no padding, no post-slice) ---------------------------
    tb = max(8, (tb // 8) * 8)                      # tile rows: multiple of 8
    if B > tb:
        TB = tb                                     # >=2 grid steps automatically
    elif B >= 1024:
        TB = _round_up(pl.cdiv(B, 2), 8)            # split for v7x megacore
    else:
        TB = B                                      # single tile == full batch dim
    grid = (pl.cdiv(B, TB),)                        # ragged last tile handled by Pallas

    resident = lambda a: pl.BlockSpec(a.shape, lambda i: (0,) * a.ndim)

    out = pl.pallas_call(
        mlp_kernel,
        out_shape=jax.ShapeDtypeStruct((B, n_out), jnp.float32),
        grid=grid,
        in_specs=[
            pl.BlockSpec((TB, K), lambda i: (i, 0)),   # x: streamed per batch tile
            resident(w1b), resident(b1f),              # weights stay VMEM-resident
            resident(w2p), resident(b2p),
            resident(w3p), resident(b3f),
        ],
        out_specs=pl.BlockSpec((TB, n_out), lambda i: (i, 0)),  # narrow direct write
        compiler_params=pltpu.CompilerParams(
            dimension_semantics=("parallel",),         # megacore on v7x
            vmem_limit_bytes=48 << 20,                 # safe on v7x's 64 MiB VMEM
        ),
    )(x2d, w1b, b1f, w2p, b2p, w3p, b3f)

    return out


def init_params(key, input_size=512):
    """Deterministic init mimicking torch.nn.Linear default (U[-1/sqrt(fan_in), ...])."""
    dims = [(input_size, 128), (128, 32), (32, 2)]
    params = []
    for fan_in, fan_out in dims:
        kw, kb, key = jax.random.split(key, 3)
        bound = 1.0 / jnp.sqrt(fan_in)
        w = jax.random.uniform(kw, (fan_in, fan_out), jnp.float32, -bound, bound)
        b = jax.random.uniform(kb, (1, fan_out), jnp.float32, -bound, bound)
        params.extend([w, b])
    return tuple(params)


if __name__ == "__main__":
    key = jax.random.PRNGKey(0)
    kx, kp = jax.random.split(key)

    B, INPUT_SIZE = 8, 512
    x = jax.random.normal(kx, (B, INPUT_SIZE), dtype=jnp.float32)
    params = init_params(kp, INPUT_SIZE)

    y = mlp_forward(x, params)
    jax.block_until_ready(y)
    assert y.shape == (B, 2)

    # Reference with the same bf16-input / f32-accumulate recipe (tight check).
    w1, b1, w2, b2, w3, b3 = params
    xb = x.astype(jnp.bfloat16)
    h1 = jnp.maximum(
        jnp.dot(xb, w1.astype(jnp.bfloat16), preferred_element_type=jnp.float32) + b1, 0.0)
    h2 = jnp.maximum(
        jnp.dot(h1.astype(jnp.bfloat16), w2.astype(jnp.bfloat16),
                preferred_element_type=jnp.float32) + b2, 0.0)
    y_bf16_ref = jnp.dot(h2.astype(jnp.bfloat16), w3.astype(jnp.bfloat16),
                         preferred_element_type=jnp.float32) + b3
    assert jnp.allclose(y, y_bf16_ref, atol=5e-3, rtol=5e-3)

    # Loose check against the full-f32 reference (bf16 rounding tolerance).
    h1f = jnp.maximum(x @ w1 + b1, 0.0)
    h2f = jnp.maximum(h1f @ w2 + b2, 0.0)
    y_f32_ref = h2f @ w3 + b3
    assert jnp.allclose(y, y_f32_ref, atol=5e-2, rtol=5e-2)

    print("KERNEL_OK")
</pallas_src>

<mosaic_0001>
module attributes {stable_mosaic.version = 11 : i64} {
  func.func @mlp_kernel(%arg0: i32, %arg1: memref<8x512xf32, #tpu.memory_space<vmem>>, %arg2: memref<512x128xbf16, #tpu.memory_space<vmem>>, %arg3: memref<1x128xf32, #tpu.memory_space<vmem>>, %arg4: memref<128x128xbf16, #tpu.memory_space<vmem>>, %arg5: memref<1x128xf32, #tpu.memory_space<vmem>>, %arg6: memref<128x2xbf16, #tpu.memory_space<vmem>>, %arg7: memref<1x2xf32, #tpu.memory_space<vmem>>, %arg8: memref<8x2xf32, #tpu.memory_space<vmem>>) attributes {dimension_semantics = [#tpu.dimension_semantics<parallel>], iteration_bounds = array<i64: 1>, scalar_prefetch = 0 : i64, scratch_operands = 0 : i64, tpu.core_type = #tpu.core_type<tc>, window_params = [{transform_indices = @transform_0, window_bounds = array<i64: 8, 512>}, {pipeline_mode = #tpu.pipeline_mode<synchronous>, transform_indices = @transform_1, window_bounds = array<i64: 512, 128>}, {pipeline_mode = #tpu.pipeline_mode<synchronous>, transform_indices = @transform_2, window_bounds = array<i64: 1, 128>}, {pipeline_mode = #tpu.pipeline_mode<synchronous>, transform_indices = @transform_3, window_bounds = array<i64: 128, 128>}, {pipeline_mode = #tpu.pipeline_mode<synchronous>, transform_indices = @transform_4, window_bounds = array<i64: 1, 128>}, {pipeline_mode = #tpu.pipeline_mode<synchronous>, transform_indices = @transform_5, window_bounds = array<i64: 128, 2>}, {pipeline_mode = #tpu.pipeline_mode<synchronous>, transform_indices = @transform_6, window_bounds = array<i64: 1, 2>}, {transform_indices = @transform_7, window_bounds = array<i64: 8, 2>}]} {
    %c0 = arith.constant 0 : index
    %c0_0 = arith.constant 0 : index
    %0 = vector.load %arg1[%c0, %c0_0] : memref<8x512xf32, #tpu.memory_space<vmem>>, vector<8x512xf32>
    %1 = arith.truncf %0 : vector<8x512xf32> to vector<8x512xbf16>
    %c0_1 = arith.constant 0 : index
    %c0_2 = arith.constant 0 : index
    %2 = vector.load %arg2[%c0_1, %c0_2] : memref<512x128xbf16, #tpu.memory_space<vmem>>, vector<512x128xbf16>
    %cst = arith.constant dense<0.000000e+00> : vector<8x128xf32>
    %3 = tpu.matmul %1, %2, %cst {dimension_numbers = #tpu.dot_dimension_numbers<[1], [0], [0], [1], [0, 0, 1, 1], [], []>} : vector<8x512xbf16>, vector<512x128xbf16>, vector<8x128xf32> -> vector<8x128xf32>
    %c0_3 = arith.constant 0 : index
    %c0_4 = arith.constant 0 : index
    %4 = vector.load %arg3[%c0_3, %c0_4] : memref<1x128xf32, #tpu.memory_space<vmem>>, vector<1x128xf32>
    %5 = vector.broadcast %4 : vector<1x128xf32> to vector<8x128xf32>
    %6 = arith.addf %3, %5 : vector<8x128xf32>
    %cst_5 = arith.constant 0.000000e+00 : f32
    %7 = vector.broadcast %cst_5 : f32 to vector<8x128xf32>
    %8 = arith.maximumf %6, %7 : vector<8x128xf32>
    %9 = arith.truncf %8 : vector<8x128xf32> to vector<8x128xbf16>
    %c0_6 = arith.constant 0 : index
    %c0_7 = arith.constant 0 : index
    %10 = vector.load %arg4[%c0_6, %c0_7] : memref<128x128xbf16, #tpu.memory_space<vmem>>, vector<128x128xbf16>
    %cst_8 = arith.constant dense<0.000000e+00> : vector<8x128xf32>
    %11 = tpu.matmul %9, %10, %cst_8 {dimension_numbers = #tpu.dot_dimension_numbers<[1], [0], [0], [1], [0, 0, 1, 1], [], []>} : vector<8x128xbf16>, vector<128x128xbf16>, vector<8x128xf32> -> vector<8x128xf32>
    %c0_9 = arith.constant 0 : index
    %c0_10 = arith.constant 0 : index
    %12 = vector.load %arg5[%c0_9, %c0_10] : memref<1x128xf32, #tpu.memory_space<vmem>>, vector<1x128xf32>
    %13 = vector.broadcast %12 : vector<1x128xf32> to vector<8x128xf32>
    %14 = arith.addf %11, %13 : vector<8x128xf32>
    %cst_11 = arith.constant 0.000000e+00 : f32
    %15 = vector.broadcast %cst_11 : f32 to vector<8x128xf32>
    %16 = arith.maximumf %14, %15 : vector<8x128xf32>
    %17 = arith.truncf %16 : vector<8x128xf32> to vector<8x128xbf16>
    %c0_12 = arith.constant 0 : index
    %c0_13 = arith.constant 0 : index
    %18 = vector.load %arg6[%c0_12, %c0_13] : memref<128x2xbf16, #tpu.memory_space<vmem>>, vector<128x2xbf16>
    %cst_14 = arith.constant dense<0.000000e+00> : vector<8x2xf32>
    %19 = tpu.matmul %17, %18, %cst_14 {dimension_numbers = #tpu.dot_dimension_numbers<[1], [0], [0], [1], [0, 0, 1, 1], [], []>} : vector<8x128xbf16>, vector<128x2xbf16>, vector<8x2xf32> -> vector<8x2xf32>
    %c0_15 = arith.constant 0 : index
    %c0_16 = arith.constant 0 : index
    %20 = vector.load %arg7[%c0_15, %c0_16] : memref<1x2xf32, #tpu.memory_space<vmem>>, vector<1x2xf32>
    %21 = vector.broadcast %20 : vector<1x2xf32> to vector<8x2xf32>
    %22 = arith.addf %19, %21 : vector<8x2xf32>
    %c0_17 = arith.constant 0 : index
    %c0_18 = arith.constant 0 : index
    %23 = vector.load %arg8[%c0_17, %c0_18] : memref<8x2xf32, #tpu.memory_space<vmem>>, vector<8x2xf32>
    tpu.vector_store %arg8[%c0_17, %c0_18], %22 {strides = array<i32>} : memref<8x2xf32, #tpu.memory_space<vmem>>, vector<8x2xf32>,
    return
  }
  func.func @transform_0(%arg0: i32) -> (i32, i32) {
    %c0_i32 = arith.constant 0 : i32
    %c0_i32_0 = arith.constant 0 : i32
    return %arg0, %c0_i32 : i32, i32
  }
  func.func @transform_1(%arg0: i32) -> (i32, i32) {
    %c0_i32 = arith.constant 0 : i32
    %c0_i32_0 = arith.constant 0 : i32
    %c0_i32_1 = arith.constant 0 : i32
    return %c0_i32, %c0_i32_0 : i32, i32
  }
  func.func @transform_2(%arg0: i32) -> (i32, i32) {
    %c0_i32 = arith.constant 0 : i32
    %c0_i32_0 = arith.constant 0 : i32
    %c0_i32_1 = arith.constant 0 : i32
    return %c0_i32, %c0_i32_0 : i32, i32
  }
  func.func @transform_3(%arg0: i32) -> (i32, i32) {
    %c0_i32 = arith.constant 0 : i32
    %c0_i32_0 = arith.constant 0 : i32
    %c0_i32_1 = arith.constant 0 : i32
    return %c0_i32, %c0_i32_0 : i32, i32
  }
  func.func @transform_4(%arg0: i32) -> (i32, i32) {
    %c0_i32 = arith.constant 0 : i32
    %c0_i32_0 = arith.constant 0 : i32
    %c0_i32_1 = arith.constant 0 : i32
    return %c0_i32, %c0_i32_0 : i32, i32
  }
  func.func @transform_5(%arg0: i32) -> (i32, i32) {
    %c0_i32 = arith.constant 0 : i32
    %c0_i32_0 = arith.constant 0 : i32
    %c0_i32_1 = arith.constant 0 : i32
    return %c0_i32, %c0_i32_0 : i32, i32
  }
  func.func @transform_6(%arg0: i32) -> (i32, i32) {
    %c0_i32 = arith.constant 0 : i32
    %c0_i32_0 = arith.constant 0 : i32
    %c0_i32_1 = arith.constant 0 : i32
    return %c0_i32, %c0_i32_0 : i32, i32
  }
  func.func @transform_7(%arg0: i32) -> (i32, i32) {
    %c0_i32 = arith.constant 0 : i32
    %c0_i32_0 = arith.constant 0 : i32
    return %arg0, %c0_i32 : i32, i32
  }
}

</mosaic_0001>

<llo_original>
// kernel: tpu_custom_call.1
$region0: #{tpu_custom_call.1}
  #allocation0 [shape = 'u32[]', space=smem, size = 0x4, offset = 0x4, fixed_abs, tag = 'smem constant byte address 0x4 - core index']
  #allocation1 [shape = 'u32[72,128]{1,0:T(1,128)}', space=vmem, size = 0x9000, scoped, tag = 'internal scratch']
  %s0 = inlined_call_operand.hbm [shape: f32[8,512], index: 0, kind: input, shape index: {}]
  %s1 = inlined_call_operand.hbm [shape: bf16[512,128], index: 1, kind: input, shape index: {}]
  %s2 = inlined_call_operand.vmem [shape: f32[1,128], index: 2, kind: input, shape index: {}]
  %s3 = inlined_call_operand.vmem [shape: bf16[128,128], index: 3, kind: input, shape index: {}]
  %s4 = inlined_call_operand.vmem [shape: f32[1,128], index: 4, kind: input, shape index: {}]
  %s5 = inlined_call_operand.vmem [shape: bf16[128,2], index: 5, kind: input, shape index: {}]
  %s6 = inlined_call_operand.vmem [shape: f32[1,2], index: 6, kind: input, shape index: {}]
  %s7 = inlined_call_operand.vmem [shape: f32[8,2], index: 7, kind: output, shape index: {}]
  %s8 = sld [smem:[#allocation0]]
  $region46: #{tpu_custom_call.1} parent=0
    _
  %s10 = ssub.s32 1, %s8
  %s11 = scalar_select 0, %s10, %s8
  $region1: #{tpu_custom_call.1} parent=0
    #allocation2 [shape = 'u8[16384]{0}', space=vmem, size = 0x4000, scoped, tag = 'input window, operand 0, single buffered']
    #allocation3 [shape = 's32[1]{0}', space=sflag, size = 0x4, scoped, tag = 'scoped memory for tpu_custom_call.1']
    #allocation4 [shape = 'u8[131072]{0}', space=vmem, size = 0x20000, scoped, tag = 'input window, operand 1, single buffered']
    #allocation5 [shape = 's32[1]{0}', space=sflag, size = 0x4, scoped, tag = 'scoped memory for tpu_custom_call.1']
    %12 = vsyncpa [#allocation3], 0
    %13 = vsyncpa [#allocation5], 0
    // Predicated region
    $region2: #{tpu_custom_call.1} parent=1 // pred_check
      _
    $region3: #{tpu_custom_call.1} parent=1 // pred_check_branch
      %15 = sbr.rel (0) target = $region5
    $region4: #{tpu_custom_call.1} parent=1 // pred_region
      %17 = vsyncadd [#allocation3], 0
      %s19 = sshll.u32 %s0, 4
      %s20 = int_to_ptr.hbm [resolvable:$true] %s19
      %s21 = sshll.u32 [#allocation2], 4
      %s22 = int_to_ptr.vmem [resolvable:$true] %s21
      %24 = dma.hbm_to_vmem [thread:$0]  %s20, 512, %s22, [#allocation3]
    $region5: #{tpu_custom_call.1} parent=1 // pred_fallthru
      _
    // Predicated region
    $region6: #{tpu_custom_call.1} parent=1 // pred_check
      _
    $region7: #{tpu_custom_call.1} parent=1 // pred_check_branch
      %26 = sbr.rel (0) target = $region9
    $region8: #{tpu_custom_call.1} parent=1 // pred_region
      %28 = vsyncadd [#allocation5], 0
      %s29 = sshll.u32 %s1, 4
      %s30 = int_to_ptr.hbm [resolvable:$true] %s29
      %s31 = sshll.u32 [#allocation4], 4
      %s32 = int_to_ptr.vmem [resolvable:$true] %s31
      %37 = dma.hbm_to_vmem [thread:$0]  %s30, 4096, %s32, [#allocation5], 64, 64, 4
    $region9: #{tpu_custom_call.1} parent=1 // pred_fallthru
      _
    // Predicated region
    $region10: #{tpu_custom_call.1} parent=1 // pred_check
      _
    $region11: #{tpu_custom_call.1} parent=1 // pred_check_branch
      %39 = sbr.rel (0) target = $region13
    $region12: #{tpu_custom_call.1} parent=1 // pred_region
      _
    $region13: #{tpu_custom_call.1} parent=1 // pred_fallthru
      _
    // Predicated region
    $region14: #{tpu_custom_call.1} parent=1 // pred_check
      _
    $region15: #{tpu_custom_call.1} parent=1 // pred_check_branch
      %41 = sbr.rel (0) target = $region17
    $region16: #{tpu_custom_call.1} parent=1 // pred_region
      _
    $region17: #{tpu_custom_call.1} parent=1 // pred_fallthru
      _
    // Predicated region
    $region18: #{tpu_custom_call.1} parent=1 // pred_check
      _
    $region19: #{tpu_custom_call.1} parent=1 // pred_check_branch
      %43 = sbr.rel (0) target = $region21
    $region20: #{tpu_custom_call.1} parent=1 // pred_region
      _
    $region21: #{tpu_custom_call.1} parent=1 // pred_fallthru
      _
    // Predicated region
    $region22: #{tpu_custom_call.1} parent=1 // pred_check
      _
    $region23: #{tpu_custom_call.1} parent=1 // pred_check_branch
      %45 = sbr.rel (0) target = $region25
    $region24: #{tpu_custom_call.1} parent=1 // pred_region
      _
    $region25: #{tpu_custom_call.1} parent=1 // pred_fallthru
      _
    // Predicated region
    $region26: #{tpu_custom_call.1} parent=1 // pred_check
      _
    $region27: #{tpu_custom_call.1} parent=1 // pred_check_branch
      %47 = sbr.rel (0) target = $region29
    $region28: #{tpu_custom_call.1} parent=1 // pred_region
      _
    $region29: #{tpu_custom_call.1} parent=1 // pred_fallthru
      _
    // Predicated region
    $region30: #{tpu_custom_call.1} parent=1 // pred_check
      _
    $region31: #{tpu_custom_call.1} parent=1 // pred_check_branch
      %49 = sbr.rel (0) target = $region33
    $region32: #{tpu_custom_call.1} parent=1 // pred_region
      %51 = dma.done [#allocation3], 512
    $region33: #{tpu_custom_call.1} parent=1 // pred_fallthru
      _
    // Predicated region
    $region34: #{tpu_custom_call.1} parent=1 // pred_check
      _
    $region35: #{tpu_custom_call.1} parent=1 // pred_check_branch
      %53 = sbr.rel (0) target = $region37
    $region36: #{tpu_custom_call.1} parent=1 // pred_region
      %55 = dma.done [#allocation5], 4096
    $region37: #{tpu_custom_call.1} parent=1 // pred_fallthru
      _
    %v56 = vld [vmem:[#allocation2] sm:$0xff]
    %v57 = vld [vmem:[#allocation2 + $0x8] sm:$0xff]
    %v58 = vld [vmem:[#allocation2 + $0x10] sm:$0xff]
    %v59 = vld [vmem:[#allocation2 + $0x18] sm:$0xff]
    %v60 = vpack.c.bf16 %v56, %v56
    %v61 = vpack.c.bf16 %v57, %v57
    %v62 = vpack.c.bf16 %v58, %v58
    %v63 = vpack.c.bf16 %v59, %v59
    %v64 = vld [vmem:[#allocation4] sm:$0xf]
    %v65 = vld [vmem:[#allocation4 + $0x4] sm:$0xf]
    %v66 = vld [vmem:[#allocation4 + $0x8] sm:$0xf]
    %v67 = vld [vmem:[#allocation4 + $0xc] sm:$0xf]
    %v68 = vld [vmem:[#allocation4 + $0x10] sm:$0xf]
    %v69 = vld [vmem:[#allocation4 + $0x14] sm:$0xf]
    %v70 = vld [vmem:[#allocation4 + $0x18] sm:$0xf]
    %v71 = vld [vmem:[#allocation4 + $0x1c] sm:$0xf]
    %v72 = vld [vmem:[#allocation4 + $0x20] sm:$0xf]
    %v73 = vld [vmem:[#allocation4 + $0x24] sm:$0xf]
    %v74 = vld [vmem:[#allocation4 + $0x28] sm:$0xf]
    %v75 = vld [vmem:[#allocation4 + $0x2c] sm:$0xf]
    %v76 = vld [vmem:[#allocation4 + $0x30] sm:$0xf]
    %v77 = vld [vmem:[#allocation4 + $0x34] sm:$0xf]
    %v78 = vld [vmem:[#allocation4 + $0x38] sm:$0xf]
    %v79 = vld [vmem:[#allocation4 + $0x3c] sm:$0xf]
    %v80 = vld [vmem:[#allocation4 + $0x40] sm:$0xf]
    %v81 = vld [vmem:[#allocation4 + $0x44] sm:$0xf]
    %v82 = vld [vmem:[#allocation4 + $0x48] sm:$0xf]
    %v83 = vld [vmem:[#allocation4 + $0x4c] sm:$0xf]
    %v84 = vld [vmem:[#allocation4 + $0x50] sm:$0xf]
    %v85 = vld [vmem:[#allocation4 + $0x54] sm:$0xf]
    %v86 = vld [vmem:[#allocation4 + $0x58] sm:$0xf]
    %v87 = vld [vmem:[#allocation4 + $0x5c] sm:$0xf]
    %v88 = vld [vmem:[#allocation4 + $0x60] sm:$0xf]
    %v89 = vld [vmem:[#allocation4 + $0x64] sm:$0xf]
    %v90 = vld [vmem:[#allocation4 + $0x68] sm:$0xf]
    %v91 = vld [vmem:[#allocation4 + $0x6c] sm:$0xf]
    %v92 = vld [vmem:[#allocation4 + $0x70] sm:$0xf]
    %v93 = vld [vmem:[#allocation4 + $0x74] sm:$0xf]
    %v94 = vld [vmem:[#allocation4 + $0x78] sm:$0xf]
    %v95 = vld [vmem:[#allocation4 + $0x7c] sm:$0xf]
    %v96 = vld [vmem:[#allocation4 + $0x80] sm:$0xf]
    %v97 = vld [vmem:[#allocation4 + $0x84] sm:$0xf]
    %v98 = vld [vmem:[#allocation4 + $0x88] sm:$0xf]
    %v99 = vld [vmem:[#allocation4 + $0x8c] sm:$0xf]
    %v100 = vld [vmem:[#allocation4 + $0x90] sm:$0xf]
    %v101 = vld [vmem:[#allocation4 + $0x94] sm:$0xf]
    %v102 = vld [vmem:[#allocation4 + $0x98] sm:$0xf]
    %v103 = vld [vmem:[#allocation4 + $0x9c] sm:$0xf]
    %v104 = vld [vmem:[#allocation4 + $0xa0] sm:$0xf]
    %v105 = vld [vmem:[#allocation4 + $0xa4] sm:$0xf]
    %v106 = vld [vmem:[#allocation4 + $0xa8] sm:$0xf]
    %v107 = vld [vmem:[#allocation4 + $0xac] sm:$0xf]
    %v108 = vld [vmem:[#allocation4 + $0xb0] sm:$0xf]
    %v109 = vld [vmem:[#allocation4 + $0xb4] sm:$0xf]
    %v110 = vld [vmem:[#allocation4 + $0xb8] sm:$0xf]
    %v111 = vld [vmem:[#allocation4 + $0xbc] sm:$0xf]
    %v112 = vld [vmem:[#allocation4 + $0xc0] sm:$0xf]
    %v113 = vld [vmem:[#allocation4 + $0xc4] sm:$0xf]
    %v114 = vld [vmem:[#allocation4 + $0xc8] sm:$0xf]
    %v115 = vld [vmem:[#allocation4 + $0xcc] sm:$0xf]
    %v116 = vld [vmem:[#allocation4 + $0xd0] sm:$0xf]
    %v117 = vld [vmem:[#allocation4 + $0xd4] sm:$0xf]
    %v118 = vld [vmem:[#allocation4 + $0xd8] sm:$0xf]
    %v119 = vld [vmem:[#allocation4 + $0xdc] sm:$0xf]
    %v120 = vld [vmem:[#allocation4 + $0xe0] sm:$0xf]
    %v121 = vld [vmem:[#allocation4 + $0xe4] sm:$0xf]
    %v122 = vld [vmem:[#allocation4 + $0xe8] sm:$0xf]
    %v123 = vld [vmem:[#allocation4 + $0xec] sm:$0xf]
    %v124 = vld [vmem:[#allocation4 + $0xf0] sm:$0xf]
    %v125 = vld [vmem:[#allocation4 + $0xf4] sm:$0xf]
    %v126 = vld [vmem:[#allocation4 + $0xf8] sm:$0xf]
    %v127 = vld [vmem:[#allocation4 + $0xfc] sm:$0xf]
    %v128 = vld [vmem:[%s2] sm:$0x1]
    %v130 = vperm.slane %v128, 0
    %v196 = vunpack.c.l.b16 %v64
    %v197 = vunpack.c.l.b16 %v65
    %v198 = vunpack.c.l.b16 %v66
    %v199 = vunpack.c.l.b16 %v67
    %v200 = vunpack.c.l.b16 %v68
    %v201 = vunpack.c.l.b16 %v69
    %v202 = vunpack.c.l.b16 %v70
    %v203 = vunpack.c.l.b16 %v71
    %v204 = vunpack.c.l.b16 %v72
    %v205 = vunpack.c.l.b16 %v73
    %v206 = vunpack.c.l.b16 %v74
    %v207 = vunpack.c.l.b16 %v75
    %v208 = vunpack.c.l.b16 %v76
    %v209 = vunpack.c.l.b16 %v77
    %v210 = vunpack.c.l.b16 %v78
    %v211 = vunpack.c.l.b16 %v79
    %v212 = vunpack.c.l.b16 %v80
    %v213 = vunpack.c.l.b16 %v81
    %v214 = vunpack.c.l.b16 %v82
    %v215 = vunpack.c.l.b16 %v83
    %v216 = vunpack.c.l.b16 %v84
    %v217 = vunpack.c.l.b16 %v85
    %v218 = vunpack.c.l.b16 %v86
    %v219 = vunpack.c.l.b16 %v87
    %v220 = vunpack.c.l.b16 %v88
    %v221 = vunpack.c.l.b16 %v89
    %v222 = vunpack.c.l.b16 %v90
    %v223 = vunpack.c.l.b16 %v91
    %v224 = vunpack.c.l.b16 %v92
    %v225 = vunpack.c.l.b16 %v93
    %v226 = vunpack.c.l.b16 %v94
    %v227 = vunpack.c.l.b16 %v95
    %v228 = vunpack.c.l.b16 %v96
    %v229 = vunpack.c.l.b16 %v97
    %v230 = vunpack.c.l.b16 %v98
    %v231 = vunpack.c.l.b16 %v99
    %v232 = vunpack.c.l.b16 %v100
    %v233 = vunpack.c.l.b16 %v101
    %v234 = vunpack.c.l.b16 %v102
    %v235 = vunpack.c.l.b16 %v103
    %v236 = vunpack.c.l.b16 %v104
    %v237 = vunpack.c.l.b16 %v105
    %v238 = vunpack.c.l.b16 %v106
    %v239 = vunpack.c.l.b16 %v107
    %v240 = vunpack.c.l.b16 %v108
    %v241 = vunpack.c.l.b16 %v109
    %v242 = vunpack.c.l.b16 %v110
    %v243 = vunpack.c.l.b16 %v111
    %v244 = vunpack.c.l.b16 %v112
    %v245 = vunpack.c.l.b16 %v113
    %v246 = vunpack.c.l.b16 %v114
    %v247 = vunpack.c.l.b16 %v115
    %v248 = vunpack.c.l.b16 %v116
    %v249 = vunpack.c.l.b16 %v117
    %v250 = vunpack.c.l.b16 %v118
    %v251 = vunpack.c.l.b16 %v119
    %v252 = vunpack.c.l.b16 %v120
    %v253 = vunpack.c.l.b16 %v121
    %v254 = vunpack.c.l.b16 %v122
    %v255 = vunpack.c.l.b16 %v123
    %v256 = vunpack.c.l.b16 %v124
    %v257 = vunpack.c.l.b16 %v125
    %v258 = vunpack.c.l.b16 %v126
    %v259 = vunpack.c.l.b16 %v127
    %v260 = vpack.c.b16 %v197, %v196
    %v261 = vpack.c.b16 %v199, %v198
    %v262 = vpack.c.b16 %v201, %v200
    %v263 = vpack.c.b16 %v203, %v202
    %v264 = vpack.c.b16 %v205, %v204
    %v265 = vpack.c.b16 %v207, %v206
    %v266 = vpack.c.b16 %v209, %v208
    %v267 = vpack.c.b16 %v211, %v210
    %v268 = vpack.c.b16 %v213, %v212
    %v269 = vpack.c.b16 %v215, %v214
    %v270 = vpack.c.b16 %v217, %v216
    %v271 = vpack.c.b16 %v219, %v218
    %v272 = vpack.c.b16 %v221, %v220
    %v273 = vpack.c.b16 %v223, %v222
    %v274 = vpack.c.b16 %v225, %v224
    %v275 = vpack.c.b16 %v227, %v226
    %v276 = vpack.c.b16 %v229, %v228
    %v277 = vpack.c.b16 %v231, %v230
    %v278 = vpack.c.b16 %v233, %v232
    %v279 = vpack.c.b16 %v235, %v234
    %v280 = vpack.c.b16 %v237, %v236
    %v281 = vpack.c.b16 %v239, %v238
    %v282 = vpack.c.b16 %v241, %v240
    %v283 = vpack.c.b16 %v243, %v242
    %v284 = vpack.c.b16 %v245, %v244
    %v285 = vpack.c.b16 %v247, %v246
    %v286 = vpack.c.b16 %v249, %v248
    %v287 = vpack.c.b16 %v251, %v250
    %v288 = vpack.c.b16 %v253, %v252
    %v289 = vpack.c.b16 %v255, %v254
    %v290 = vpack.c.b16 %v257, %v256
    %v291 = vpack.c.b16 %v259, %v258
    %324 = vmatpush.bf16.msra.mxu0 %v267
    %325 = vmatpush.bf16.msra.mxu0 %v266
    %326 = vmatpush.bf16.msra.mxu0 %v265
    %327 = vmatpush.bf16.msra.mxu0 %v264
    %328 = vmatpush.bf16.msra.mxu0 %v263
    %329 = vmatpush.bf16.msra.mxu0 %v262
    %330 = vmatpush.bf16.msra.mxu0 %v261
    %331 = vmatpush.bf16.msra.mxu0 %v260
    %332 = vmatmul.bf16.gmra.mxu0 %v60
    %v333 = vpop.f32.mrf.mxu0
    %v334 = vadd.f32 %v130, %v333
    %v335 = vpop.f32.mrf.mxu0
    %336 = vdwg.mxu0
    %337 = vmatpush.bf16.msra.mxu0 %v275
    %338 = vmatpush.bf16.msra.mxu0 %v274
    %339 = vmatpush.bf16.msra.mxu0 %v273
    %340 = vmatpush.bf16.msra.mxu0 %v272
    %341 = vmatpush.bf16.msra.mxu0 %v271
    %342 = vmatpush.bf16.msra.mxu0 %v270
    %343 = vmatpush.bf16.msra.mxu0 %v269
    %344 = vmatpush.bf16.msra.mxu0 %v268
    %345 = vmatmul.bf16.gmra.mxu0 %v61
    %v346 = vpop.f32.mrf.mxu0
    %v347 = vadd.f32 %v334, %v346
    %v348 = vpop.f32.mrf.mxu0
    %349 = vdwg.mxu0
    %350 = vmatpush.bf16.msra.mxu0 %v283
    %351 = vmatpush.bf16.msra.mxu0 %v282
    %352 = vmatpush.bf16.msra.mxu0 %v281
    %353 = vmatpush.bf16.msra.mxu0 %v280
    %354 = vmatpush.bf16.msra.mxu0 %v279
    %355 = vmatpush.bf16.msra.mxu0 %v278
    %356 = vmatpush.bf16.msra.mxu0 %v277
    %357 = vmatpush.bf16.msra.mxu0 %v276
    %358 = vmatmul.bf16.gmra.mxu0 %v62
    %v359 = vpop.f32.mrf.mxu0
    %v360 = vadd.f32 %v347, %v359
    %v361 = vpop.f32.mrf.mxu0
    %362 = vdwg.mxu0
    %363 = vmatpush.bf16.msra.mxu0 %v291
    %364 = vmatpush.bf16.msra.mxu0 %v290
    %365 = vmatpush.bf16.msra.mxu0 %v289
    %366 = vmatpush.bf16.msra.mxu0 %v288
    %367 = vmatpush.bf16.msra.mxu0 %v287
    %368 = vmatpush.bf16.msra.mxu0 %v286
    %369 = vmatpush.bf16.msra.mxu0 %v285
    %370 = vmatpush.bf16.msra.mxu0 %v284
    %371 = vmatmul.bf16.gmra.mxu0 %v63
    %v372 = vpop.f32.mrf.mxu0
    %v373 = vadd.f32 %v360, %v372
    %v374 = vpop.f32.mrf.mxu0
    %375 = vdwg.mxu0
    %v376 = vmax.f32 %v373, 0.0
    %v377 = vpack.c.bf16 %v376, %v376
    %v378 = vld [vmem:[%s3] sm:$0xf]
    %v379 = vld [vmem:[%s3 + $0x4] sm:$0xf]
    %v380 = vld [vmem:[%s3 + $0x8] sm:$0xf]
    %v381 = vld [vmem:[%s3 + $0xc] sm:$0xf]
    %v382 = vld [vmem:[%s3 + $0x10] sm:$0xf]
    %v383 = vld [vmem:[%s3 + $0x14] sm:$0xf]
    %v384 = vld [vmem:[%s3 + $0x18] sm:$0xf]
    %v385 = vld [vmem:[%s3 + $0x1c] sm:$0xf]
    %v386 = vld [vmem:[%s3 + $0x20] sm:$0xf]
    %v387 = vld [vmem:[%s3 + $0x24] sm:$0xf]
    %v388 = vld [vmem:[%s3 + $0x28] sm:$0xf]
    %v389 = vld [vmem:[%s3 + $0x2c] sm:$0xf]
    %v390 = vld [vmem:[%s3 + $0x30] sm:$0xf]
    %v391 = vld [vmem:[%s3 + $0x34] sm:$0xf]
    %v392 = vld [vmem:[%s3 + $0x38] sm:$0xf]
    %v393 = vld [vmem:[%s3 + $0x3c] sm:$0xf]
    %v394 = vld [vmem:[%s4] sm:$0x1]
    %v396 = vperm.slane %v394, 0
    %v414 = vunpack.c.l.b16 %v378
    %v415 = vunpack.c.l.b16 %v379
    %v416 = vunpack.c.l.b16 %v380
    %v417 = vunpack.c.l.b16 %v381
    %v418 = vunpack.c.l.b16 %v382
    %v419 = vunpack.c.l.b16 %v383
    %v420 = vunpack.c.l.b16 %v384
    %v421 = vunpack.c.l.b16 %v385
    %v422 = vunpack.c.l.b16 %v386
    %v423 = vunpack.c.l.b16 %v387
    %v424 = vunpack.c.l.b16 %v388
    %v425 = vunpack.c.l.b16 %v389
    %v426 = vunpack.c.l.b16 %v390
    %v427 = vunpack.c.l.b16 %v391
    %v428 = vunpack.c.l.b16 %v392
    %v429 = vunpack.c.l.b16 %v393
    %v430 = vpack.c.b16 %v415, %v414
    %v431 = vpack.c.b16 %v417, %v416
    %v432 = vpack.c.b16 %v419, %v418
    %v433 = vpack.c.b16 %v421, %v420
    %v434 = vpack.c.b16 %v423, %v422
    %v435 = vpack.c.b16 %v425, %v424
    %v436 = vpack.c.b16 %v427, %v426
    %v437 = vpack.c.b16 %v429, %v428
    %446 = vmatpush.bf16.msra.mxu0 %v437
    %447 = vmatpush.bf16.msra.mxu0 %v436
    %448 = vmatpush.bf16.msra.mxu0 %v435
    %449 = vmatpush.bf16.msra.mxu0 %v434
    %450 = vmatpush.bf16.msra.mxu0 %v433
    %451 = vmatpush.bf16.msra.mxu0 %v432
    %452 = vmatpush.bf16.msra.mxu0 %v431
    %453 = vmatpush.bf16.msra.mxu0 %v430
    %454 = vmatmul.bf16.gmra.mxu0 %v377
    %v455 = vpop.f32.mrf.mxu0
    %v456 = vadd.f32 %v396, %v455
    %v457 = vpop.f32.mrf.mxu0
    %458 = vdwg.mxu0
    %v459 = vmax.f32 %v456, 0.0
    %v460 = vpack.c.bf16 %v459, %v459
    %v461 = vld [vmem:[%s5] sm:$0xf]
    %v462 = vld [vmem:[%s5 + $0x4] sm:$0xf]
    %v463 = vld [vmem:[%s5 + $0x8] sm:$0xf]
    %v464 = vld [vmem:[%s5 + $0xc] sm:$0xf]
    %v465 = vld [vmem:[%s5 + $0x10] sm:$0xf]
    %v466 = vld [vmem:[%s5 + $0x14] sm:$0xf]
    %v467 = vld [vmem:[%s5 + $0x18] sm:$0xf]
    %v468 = vld [vmem:[%s5 + $0x1c] sm:$0xf]
    %v469 = vld [vmem:[%s5 + $0x20] sm:$0xf]
    %v470 = vld [vmem:[%s5 + $0x24] sm:$0xf]
    %v471 = vld [vmem:[%s5 + $0x28] sm:$0xf]
    %v472 = vld [vmem:[%s5 + $0x2c] sm:$0xf]
    %v473 = vld [vmem:[%s5 + $0x30] sm:$0xf]
    %v474 = vld [vmem:[%s5 + $0x34] sm:$0xf]
    %v475 = vld [vmem:[%s5 + $0x38] sm:$0xf]
    %v476 = vld [vmem:[%s5 + $0x3c] sm:$0xf]
    %v477 = vld [vmem:[%s6] sm:$0x1]
    %v479 = vperm.slane %v477, 0
    %v497 = vunpack.c.l.b16 %v461
    %v498 = vunpack.c.l.b16 %v462
    %v499 = vunpack.c.l.b16 %v463
    %v500 = vunpack.c.l.b16 %v464
    %v501 = vunpack.c.l.b16 %v465
    %v502 = vunpack.c.l.b16 %v466
    %v503 = vunpack.c.l.b16 %v467
    %v504 = vunpack.c.l.b16 %v468
    %v505 = vunpack.c.l.b16 %v469
    %v506 = vunpack.c.l.b16 %v470
    %v507 = vunpack.c.l.b16 %v471
    %v508 = vunpack.c.l.b16 %v472
    %v509 = vunpack.c.l.b16 %v473
    %v510 = vunpack.c.l.b16 %v474
    %v511 = vunpack.c.l.b16 %v475
    %v512 = vunpack.c.l.b16 %v476
    %v513 = vpack.c.b16 %v498, %v497
    %v514 = vpack.c.b16 %v500, %v499
    %v515 = vpack.c.b16 %v502, %v501
    %v516 = vpack.c.b16 %v504, %v503
    %v517 = vpack.c.b16 %v506, %v505
    %v518 = vpack.c.b16 %v508, %v507
    %v519 = vpack.c.b16 %v510, %v509
    %v520 = vpack.c.b16 %v512, %v511
    %529 = vmatpush.bf16.msra.mxu0 %v520
    %530 = vmatpush.bf16.msra.mxu0 %v519
    %531 = vmatpush.bf16.msra.mxu0 %v518
    %532 = vmatpush.bf16.msra.mxu0 %v517
    %533 = vmatpush.bf16.msra.mxu0 %v516
    %534 = vmatpush.bf16.msra.mxu0 %v515
    %535 = vmatpush.bf16.msra.mxu0 %v514
    %536 = vmatpush.bf16.msra.mxu0 %v513
    %537 = vmatmul.bf16.gmra.mxu0 %v460
    %v538 = vpop.f32.mrf.mxu0
    %v539 = vadd.f32 %v479, %v538
    %v540 = vpop.f32.mrf.mxu0
    %541 = vdwg.mxu0
    %vm542 = vcmask 15360
    %543 = vst.msk [vmem:[%s7] sm:$0xff] %vm542, %v539
    // Predicated region
    $region38: #{tpu_custom_call.1} parent=1 // pred_check
      _
    $region39: #{tpu_custom_call.1} parent=1 // pred_check_branch
      %545 = sbr.rel (0) target = $region41
    $region40: #{tpu_custom_call.1} parent=1 // pred_region
      _
    $region41: #{tpu_custom_call.1} parent=1 // pred_fallthru
      _
    // Predicated region
    $region42: #{tpu_custom_call.1} parent=1 // pred_check
      _
    $region43: #{tpu_custom_call.1} parent=1 // pred_check_branch
      %547 = sbr.rel (0) target = $region45
    $region44: #{tpu_custom_call.1} parent=1 // pred_region
      _
    $region45: #{tpu_custom_call.1} parent=1 // pred_fallthru
      _
    %548 = vsyncpa [#allocation3], 1
    %549 = vsyncpa [#allocation5], 1

</llo_original>
